<compile_context>
chip_gen: v7x
topology: tpu7x:2x2x1
jax: 0.10.0
libtpu: 0.0.40
codegen_flags: <defaults>
</compile_context>

<pallas_src>
import math

import jax
import jax.numpy as jnp
from jax.experimental import pallas as pl
from jax.experimental.pallas import tpu as pltpu


def _mlp_kernel(x_ref, w1_ref, wf_ref, b_ref, o_ref):
    # x_ref: (tm, D) f32; w1_ref/wf_ref: (D, D) bf16; b_ref: (1, D) f32.
    x = x_ref[...]
    w1 = w1_ref[...].astype(jnp.float32)   # bf16 -> f32 (VPU), MXU matmul in f32
    wf = wf_ref[...].astype(jnp.float32)
    b = b_ref[...]

    # v1 = linear(x)  (bias=False)
    v1 = jnp.dot(x, w1, preferred_element_type=jnp.float32)
    # v2 = v1 - 1 ; v3 = relu(v2)
    v3 = jnp.maximum(v1 - 1.0, 0.0)
    # v5 = fc(linear(v3)) = v3 @ (W1ᵀ @ W2ᵀ) + b   (matmuls fused via W_fused)
    v5 = jnp.dot(v3, wf, preferred_element_type=jnp.float32) + b

    o_ref[...] = v5.astype(o_ref.dtype)


def prepare_params(w1, w2, b2, weight_dtype=jnp.bfloat16):
    """One-time parameter prep (outside the per-call hot path).

    w1, w2 are torch-layout (out, in); returns
      w1_t    : (in, out)  weight_dtype
      w_fused : (in, out)  weight_dtype,  W1ᵀ @ W2ᵀ  (fuses the last two matmuls)
      b2_2d   : (1, D)     f32
    """
    w1_t = jnp.asarray(w1, jnp.float32).T
    w_fused = w1_t @ jnp.asarray(w2, jnp.float32).T
    b2_2d = jnp.asarray(b2, jnp.float32).reshape(1, -1)
    return w1_t.astype(weight_dtype), w_fused.astype(weight_dtype), b2_2d


def mlp_forward(x, w1_t, w_fused, b2_2d, *, tm=None):
    """x: (B, D) f32; w1_t/w_fused: (D, D) bf16 (pre-transposed/fused); b2_2d: (1, D)."""
    B, D = x.shape
    if tm is None:
        tm = B if B <= 128 else 128
    grid = (pl.cdiv(B, tm),)

    cost = pl.CostEstimate(
        flops=2 * 2 * B * D * D,           # two (B,D)x(D,D) matmuls
        transcendentals=0,
        bytes_accessed=(w1_t.size * w1_t.dtype.itemsize
                        + w_fused.size * w_fused.dtype.itemsize
                        + 2 * x.size * x.dtype.itemsize
                        + b2_2d.size * b2_2d.dtype.itemsize),
    )

    return pl.pallas_call(
        _mlp_kernel,
        out_shape=jax.ShapeDtypeStruct((B, D), x.dtype),
        grid_spec=pltpu.PrefetchScalarGridSpec(
            num_scalar_prefetch=0,
            grid=grid,
            in_specs=[
                pl.BlockSpec((tm, D), lambda i: (i, 0)),   # activations tiled on batch
                pl.BlockSpec((D, D), lambda i: (0, 0)),    # weights VMEM-resident
                pl.BlockSpec((D, D), lambda i: (0, 0)),
                pl.BlockSpec((1, D), lambda i: (0, 0)),
            ],
            out_specs=pl.BlockSpec((tm, D), lambda i: (i, 0)),
        ),
        compiler_params=pltpu.CompilerParams(
            dimension_semantics=("parallel",),   # shards batch over v7x's 2 TCs
        ),
        cost_estimate=cost,
    )(x, w1_t, w_fused, b2_2d)


def _reference_fused(x, w1_t_q, w_fused_q, b2_2d):
    # Same fused math / same (bf16-quantized) weights as the kernel.
    w1 = w1_t_q.astype(jnp.float32)
    wf = w_fused_q.astype(jnp.float32)
    v3 = jnp.maximum(x @ w1 - 1.0, 0.0)
    return v3 @ wf + b2_2d


def _reference_original(x, w1, w2, b2):
    # Original (unfused, full-f32) module semantics.
    v1 = x @ w1.T
    v3 = jnp.maximum(v1 - 1.0, 0.0)
    v4 = v3 @ w1.T
    return v4 @ w2.T + b2


if __name__ == "__main__":
    B, D = 1, 256  # small, self-consistent stand-in for the broken 224 -> 1000 dims

    key = jax.random.PRNGKey(0)
    kx, kw1, kw2, kb2 = jax.random.split(key, 4)

    # PyTorch-Linear-style uniform init: U(-1/sqrt(fan_in), +1/sqrt(fan_in))
    bound = 1.0 / math.sqrt(D)
    x = jax.random.normal(kx, (B, D), dtype=jnp.float32)
    w1 = jax.random.uniform(kw1, (D, D), jnp.float32, -bound, bound)  # linear.weight (out, in), bias=False
    w2 = jax.random.uniform(kw2, (D, D), jnp.float32, -bound, bound)  # fc.weight     (out, in)
    b2 = jax.random.uniform(kb2, (D,), jnp.float32, -bound, bound)    # fc.bias

    # One-time weight prep (transpose + fuse + bf16), then the kernel call.
    w1_t, w_fused, b2_2d = prepare_params(w1, w2, b2)
    out = mlp_forward(x, w1_t, w_fused, b2_2d)
    out = jax.block_until_ready(out)
    assert out.shape == (B, D)

    # Check 1: exact kernel math (same quantized weights, fused formulation).
    ref_fused = _reference_fused(x, w1_t, w_fused, b2_2d)
    assert jnp.allclose(out, ref_fused, atol=1e-3, rtol=1e-3), "mismatch vs fused reference"

    # Check 2: fidelity to original module semantics (f32, unfused); looser
    # tolerance only accounts for the bf16 weight quantization.
    ref_orig = _reference_original(x, w1, w2, b2)
    assert jnp.allclose(out, ref_orig, atol=1e-2, rtol=1e-2), "mismatch vs original semantics"

    print("KERNEL_OK")
</pallas_src>

<mosaic_0001>
module attributes {stable_mosaic.version = 11 : i64} {
  func.func @_mlp_kernel(%arg0: i32, %arg1: memref<1x256xf32, #tpu.memory_space<vmem>>, %arg2: memref<256x256xbf16, #tpu.memory_space<vmem>>, %arg3: memref<256x256xbf16, #tpu.memory_space<vmem>>, %arg4: memref<1x256xf32, #tpu.memory_space<vmem>>, %arg5: memref<1x256xf32, #tpu.memory_space<vmem>>) attributes {dimension_semantics = [#tpu.dimension_semantics<parallel>], iteration_bounds = array<i64: 1>, scalar_prefetch = 0 : i64, scratch_operands = 0 : i64, tpu.core_type = #tpu.core_type<tc>, window_params = [{transform_indices = @transform_0, window_bounds = array<i64: 1, 256>}, {pipeline_mode = #tpu.pipeline_mode<synchronous>, transform_indices = @transform_1, window_bounds = array<i64: 256, 256>}, {pipeline_mode = #tpu.pipeline_mode<synchronous>, transform_indices = @transform_2, window_bounds = array<i64: 256, 256>}, {pipeline_mode = #tpu.pipeline_mode<synchronous>, transform_indices = @transform_3, window_bounds = array<i64: 1, 256>}, {transform_indices = @transform_4, window_bounds = array<i64: 1, 256>}]} {
    %c0 = arith.constant 0 : index
    %c0_0 = arith.constant 0 : index
    %0 = vector.load %arg1[%c0, %c0_0] : memref<1x256xf32, #tpu.memory_space<vmem>>, vector<1x256xf32>
    %c0_1 = arith.constant 0 : index
    %c0_2 = arith.constant 0 : index
    %1 = vector.load %arg2[%c0_1, %c0_2] : memref<256x256xbf16, #tpu.memory_space<vmem>>, vector<256x256xbf16>
    %2 = arith.extf %1 : vector<256x256xbf16> to vector<256x256xf32>
    %c0_3 = arith.constant 0 : index
    %c0_4 = arith.constant 0 : index
    %3 = vector.load %arg3[%c0_3, %c0_4] : memref<256x256xbf16, #tpu.memory_space<vmem>>, vector<256x256xbf16>
    %4 = arith.extf %3 : vector<256x256xbf16> to vector<256x256xf32>
    %c0_5 = arith.constant 0 : index
    %c0_6 = arith.constant 0 : index
    %5 = vector.load %arg4[%c0_5, %c0_6] : memref<1x256xf32, #tpu.memory_space<vmem>>, vector<1x256xf32>
    %cst = arith.constant dense<0.000000e+00> : vector<1x256xf32>
    %6 = tpu.matmul %0, %2, %cst {dimension_numbers = #tpu.dot_dimension_numbers<[1], [0], [0], [1], [0, 0, 1, 1], [], []>} : vector<1x256xf32>, vector<256x256xf32>, vector<1x256xf32> -> vector<1x256xf32>
    %cst_7 = arith.constant 1.000000e+00 : f32
    %7 = vector.broadcast %cst_7 : f32 to vector<1x256xf32>
    %8 = arith.subf %6, %7 : vector<1x256xf32>
    %cst_8 = arith.constant 0.000000e+00 : f32
    %9 = vector.broadcast %cst_8 : f32 to vector<1x256xf32>
    %10 = arith.maximumf %8, %9 : vector<1x256xf32>
    %cst_9 = arith.constant dense<0.000000e+00> : vector<1x256xf32>
    %11 = tpu.matmul %10, %4, %cst_9 {dimension_numbers = #tpu.dot_dimension_numbers<[1], [0], [0], [1], [0, 0, 1, 1], [], []>} : vector<1x256xf32>, vector<256x256xf32>, vector<1x256xf32> -> vector<1x256xf32>
    %12 = arith.addf %11, %5 : vector<1x256xf32>
    %c0_10 = arith.constant 0 : index
    %c0_11 = arith.constant 0 : index
    %13 = vector.load %arg5[%c0_10, %c0_11] : memref<1x256xf32, #tpu.memory_space<vmem>>, vector<1x256xf32>
    tpu.vector_store %arg5[%c0_10, %c0_11], %12 {strides = array<i32>} : memref<1x256xf32, #tpu.memory_space<vmem>>, vector<1x256xf32>,
    return
  }
  func.func @transform_0(%arg0: i32) -> (i32, i32) {
    %c0_i32 = arith.constant 0 : i32
    %c0_i32_0 = arith.constant 0 : i32
    return %arg0, %c0_i32 : i32, i32
  }
  func.func @transform_1(%arg0: i32) -> (i32, i32) {
    %c0_i32 = arith.constant 0 : i32
    %c0_i32_0 = arith.constant 0 : i32
    %c0_i32_1 = arith.constant 0 : i32
    return %c0_i32, %c0_i32_0 : i32, i32
  }
  func.func @transform_2(%arg0: i32) -> (i32, i32) {
    %c0_i32 = arith.constant 0 : i32
    %c0_i32_0 = arith.constant 0 : i32
    %c0_i32_1 = arith.constant 0 : i32
    return %c0_i32, %c0_i32_0 : i32, i32
  }
  func.func @transform_3(%arg0: i32) -> (i32, i32) {
    %c0_i32 = arith.constant 0 : i32
    %c0_i32_0 = arith.constant 0 : i32
    %c0_i32_1 = arith.constant 0 : i32
    return %c0_i32, %c0_i32_0 : i32, i32
  }
  func.func @transform_4(%arg0: i32) -> (i32, i32) {
    %c0_i32 = arith.constant 0 : i32
    %c0_i32_0 = arith.constant 0 : i32
    return %arg0, %c0_i32 : i32, i32
  }
}

</mosaic_0001>

<llo_original>
// kernel: tpu_custom_call.1
$region0: #{tpu_custom_call.1}
  #allocation0 [shape = 'u32[]', space=smem, size = 0x4, offset = 0x4, fixed_abs, tag = 'smem constant byte address 0x4 - core index']
  #allocation1 [shape = 'u32[144,128]{1,0:T(1,128)}', space=vmem, size = 0x12000, scoped, tag = 'internal scratch']
  %s0 = inlined_call_operand.hbm [shape: f32[1,256], index: 0, kind: input, shape index: {}]
  %s1 = inlined_call_operand.hbm [shape: bf16[256,256], index: 1, kind: input, shape index: {}]
  %s2 = inlined_call_operand.hbm [shape: bf16[256,256], index: 2, kind: input, shape index: {}]
  %s3 = inlined_call_operand.vmem [shape: f32[1,256], index: 3, kind: input, shape index: {}]
  %s4 = inlined_call_operand.hbm [shape: f32[1,256], index: 4, kind: output, shape index: {}]
  %s5 = sld [smem:[#allocation0]]
  $region38: #{tpu_custom_call.1} parent=0
    _
  %s7 = ssub.s32 1, %s5
  %s8 = scalar_select 0, %s7, %s5
  $region1: #{tpu_custom_call.1} parent=0
    #allocation2 [shape = 'u8[1024]{0}', space=vmem, size = 0x400, scoped, tag = 'input window, operand 0, single buffered']
    #allocation3 [shape = 's32[1]{0}', space=sflag, size = 0x4, scoped, tag = 'scoped memory for tpu_custom_call.1']
    #allocation4 [shape = 's32[1]{0}', space=sflag, size = 0x4, scoped, tag = 'scoped memory for tpu_custom_call.1']
    #allocation5 [shape = 'u8[131072]{0}', space=vmem, size = 0x20000, scoped, tag = 'input window, operand 1, single buffered']
    #allocation6 [shape = 's32[1]{0}', space=sflag, size = 0x4, scoped, tag = 'scoped memory for tpu_custom_call.1']
    #allocation7 [shape = 'u8[131072]{0}', space=vmem, size = 0x20000, scoped, tag = 'input window, operand 2, single buffered']
    #allocation8 [shape = 'u8[1024]{0}', space=vmem, size = 0x400, scoped, tag = 'output window, operand 0, single buffered']
    %9 = vsyncpa [#allocation3], 0
    %10 = vsyncpa [#allocation6], 0
    %11 = vsyncpa [#allocation4], 0
    // Predicated region
    $region2: #{tpu_custom_call.1} parent=1 // pred_check
      _
    $region3: #{tpu_custom_call.1} parent=1 // pred_check_branch
      %13 = sbr.rel (0) target = $region5
    $region4: #{tpu_custom_call.1} parent=1 // pred_region
      %s15 = ssub.s32 32, 32
      %16 = vsyncadd [#allocation3], %s15
      %s18 = sshll.u32 [#allocation2], 4
      %s19 = int_to_ptr.vmem [resolvable:$true] %s18
      %21 = dma.hbm_to_vmem [thread:$0]  %s0, 32, %s19, [#allocation3]
    $region5: #{tpu_custom_call.1} parent=1 // pred_fallthru
      _
    // Predicated region
    $region6: #{tpu_custom_call.1} parent=1 // pred_check
      _
    $region7: #{tpu_custom_call.1} parent=1 // pred_check_branch
      %23 = sbr.rel (0) target = $region9
    $region8: #{tpu_custom_call.1} parent=1 // pred_region
      %s25 = ssub.s32 4096, 4096
      %26 = vsyncadd [#allocation6], %s25
      %s27 = sshll.u32 [#allocation5], 4
      %s28 = int_to_ptr.vmem [resolvable:$true] %s27
      %33 = dma.hbm_to_vmem [thread:$0]  %s1, 4096, %s28, [#allocation6], 128, 128, 8
    $region9: #{tpu_custom_call.1} parent=1 // pred_fallthru
      _
    // Predicated region
    $region10: #{tpu_custom_call.1} parent=1 // pred_check
      _
    $region11: #{tpu_custom_call.1} parent=1 // pred_check_branch
      %35 = sbr.rel (0) target = $region13
    $region12: #{tpu_custom_call.1} parent=1 // pred_region
      %s37 = ssub.s32 4096, 4096
      %38 = vsyncadd [#allocation6], %s37
      %s39 = sshll.u32 [#allocation7], 4
      %s40 = int_to_ptr.vmem [resolvable:$true] %s39
      %45 = dma.hbm_to_vmem [thread:$0]  %s2, 4096, %s40, [#allocation6], 128, 128, 8
    $region13: #{tpu_custom_call.1} parent=1 // pred_fallthru
      _
    // Predicated region
    $region14: #{tpu_custom_call.1} parent=1 // pred_check
      _
    $region15: #{tpu_custom_call.1} parent=1 // pred_check_branch
      %47 = sbr.rel (0) target = $region17
    $region16: #{tpu_custom_call.1} parent=1 // pred_region
      _
    $region17: #{tpu_custom_call.1} parent=1 // pred_fallthru
      _
    // Predicated region
    $region18: #{tpu_custom_call.1} parent=1 // pred_check
      _
    $region19: #{tpu_custom_call.1} parent=1 // pred_check_branch
      %49 = sbr.rel (0) target = $region21
    $region20: #{tpu_custom_call.1} parent=1 // pred_region
      %50 = dma.done [#allocation3], 32
    $region21: #{tpu_custom_call.1} parent=1 // pred_fallthru
      _
    // Predicated region
    $region22: #{tpu_custom_call.1} parent=1 // pred_check
      _
    $region23: #{tpu_custom_call.1} parent=1 // pred_check_branch
      %52 = sbr.rel (0) target = $region25
    $region24: #{tpu_custom_call.1} parent=1 // pred_region
      %53 = dma.done [#allocation6], 4096
    $region25: #{tpu_custom_call.1} parent=1 // pred_fallthru
      _
    // Predicated region
    $region26: #{tpu_custom_call.1} parent=1 // pred_check
      _
    $region27: #{tpu_custom_call.1} parent=1 // pred_check_branch
      %55 = sbr.rel (0) target = $region29
    $region28: #{tpu_custom_call.1} parent=1 // pred_region
      %56 = dma.done [#allocation6], 4096
    $region29: #{tpu_custom_call.1} parent=1 // pred_fallthru
      _
    %v57 = vld [vmem:[#allocation2] sm:$0x3]
    %v58 = vld [vmem:[#allocation5] sm:$0xff]
    %v59 = vld [vmem:[#allocation5 + $0x8] sm:$0xff]
    %v60 = vld [vmem:[#allocation5 + $0x10] sm:$0xff]
    %v61 = vld [vmem:[#allocation5 + $0x18] sm:$0xff]
    %v62 = vld [vmem:[#allocation5 + $0x20] sm:$0xff]
    %v63 = vld [vmem:[#allocation5 + $0x28] sm:$0xff]
    %v64 = vld [vmem:[#allocation5 + $0x30] sm:$0xff]
    %v65 = vld [vmem:[#allocation5 + $0x38] sm:$0xff]
    %v66 = vld [vmem:[#allocation5 + $0x40] sm:$0xff]
    %v67 = vld [vmem:[#allocation5 + $0x48] sm:$0xff]
    %v68 = vld [vmem:[#allocation5 + $0x50] sm:$0xff]
    %v69 = vld [vmem:[#allocation5 + $0x58] sm:$0xff]
    %v70 = vld [vmem:[#allocation5 + $0x60] sm:$0xff]
    %v71 = vld [vmem:[#allocation5 + $0x68] sm:$0xff]
    %v72 = vld [vmem:[#allocation5 + $0x70] sm:$0xff]
    %v73 = vld [vmem:[#allocation5 + $0x78] sm:$0xff]
    %v74 = vld [vmem:[#allocation5 + $0x80] sm:$0xff]
    %v75 = vld [vmem:[#allocation5 + $0x88] sm:$0xff]
    %v76 = vld [vmem:[#allocation5 + $0x90] sm:$0xff]
    %v77 = vld [vmem:[#allocation5 + $0x98] sm:$0xff]
    %v78 = vld [vmem:[#allocation5 + $0xa0] sm:$0xff]
    %v79 = vld [vmem:[#allocation5 + $0xa8] sm:$0xff]
    %v80 = vld [vmem:[#allocation5 + $0xb0] sm:$0xff]
    %v81 = vld [vmem:[#allocation5 + $0xb8] sm:$0xff]
    %v82 = vld [vmem:[#allocation5 + $0xc0] sm:$0xff]
    %v83 = vld [vmem:[#allocation5 + $0xc8] sm:$0xff]
    %v84 = vld [vmem:[#allocation5 + $0xd0] sm:$0xff]
    %v85 = vld [vmem:[#allocation5 + $0xd8] sm:$0xff]
    %v86 = vld [vmem:[#allocation5 + $0xe0] sm:$0xff]
    %v87 = vld [vmem:[#allocation5 + $0xe8] sm:$0xff]
    %v88 = vld [vmem:[#allocation5 + $0xf0] sm:$0xff]
    %v89 = vld [vmem:[#allocation5 + $0xf8] sm:$0xff]
    %v90 = vunpack.c.l.bf16 %v58
    %v91 = vunpack.c.h.bf16 %v58
    %v92 = vunpack.c.l.bf16 %v59
    %v93 = vunpack.c.h.bf16 %v59
    %v94 = vunpack.c.l.bf16 %v60
    %v95 = vunpack.c.h.bf16 %v60
    %v96 = vunpack.c.l.bf16 %v61
    %v97 = vunpack.c.h.bf16 %v61
    %v98 = vunpack.c.l.bf16 %v62
    %v99 = vunpack.c.h.bf16 %v62
    %v100 = vunpack.c.l.bf16 %v63
    %v101 = vunpack.c.h.bf16 %v63
    %v102 = vunpack.c.l.bf16 %v64
    %v103 = vunpack.c.h.bf16 %v64
    %v104 = vunpack.c.l.bf16 %v65
    %v105 = vunpack.c.h.bf16 %v65
    %v106 = vunpack.c.l.bf16 %v66
    %v107 = vunpack.c.h.bf16 %v66
    %v108 = vunpack.c.l.bf16 %v67
    %v109 = vunpack.c.h.bf16 %v67
    %v110 = vunpack.c.l.bf16 %v68
    %v111 = vunpack.c.h.bf16 %v68
    %v112 = vunpack.c.l.bf16 %v69
    %v113 = vunpack.c.h.bf16 %v69
    %v114 = vunpack.c.l.bf16 %v70
    %v115 = vunpack.c.h.bf16 %v70
    %v116 = vunpack.c.l.bf16 %v71
    %v117 = vunpack.c.h.bf16 %v71
    %v118 = vunpack.c.l.bf16 %v72
    %v119 = vunpack.c.h.bf16 %v72
    %v120 = vunpack.c.l.bf16 %v73
    %v121 = vunpack.c.h.bf16 %v73
    %v122 = vunpack.c.l.bf16 %v74
    %v123 = vunpack.c.h.bf16 %v74
    %v124 = vunpack.c.l.bf16 %v75
    %v125 = vunpack.c.h.bf16 %v75
    %v126 = vunpack.c.l.bf16 %v76
    %v127 = vunpack.c.h.bf16 %v76
    %v128 = vunpack.c.l.bf16 %v77
    %v129 = vunpack.c.h.bf16 %v77
    %v130 = vunpack.c.l.bf16 %v78
    %v131 = vunpack.c.h.bf16 %v78
    %v132 = vunpack.c.l.bf16 %v79
    %v133 = vunpack.c.h.bf16 %v79
    %v134 = vunpack.c.l.bf16 %v80
    %v135 = vunpack.c.h.bf16 %v80
    %v136 = vunpack.c.l.bf16 %v81
    %v137 = vunpack.c.h.bf16 %v81
    %v138 = vunpack.c.l.bf16 %v82
    %v139 = vunpack.c.h.bf16 %v82
    %v140 = vunpack.c.l.bf16 %v83
    %v141 = vunpack.c.h.bf16 %v83
    %v142 = vunpack.c.l.bf16 %v84
    %v143 = vunpack.c.h.bf16 %v84
    %v144 = vunpack.c.l.bf16 %v85
    %v145 = vunpack.c.h.bf16 %v85
    %v146 = vunpack.c.l.bf16 %v86
    %v147 = vunpack.c.h.bf16 %v86
    %v148 = vunpack.c.l.bf16 %v87
    %v149 = vunpack.c.h.bf16 %v87
    %v150 = vunpack.c.l.bf16 %v88
    %v151 = vunpack.c.h.bf16 %v88
    %v152 = vunpack.c.l.bf16 %v89
    %v153 = vunpack.c.h.bf16 %v89
    %v154 = vld [vmem:[#allocation7] sm:$0xff]
    %v155 = vld [vmem:[#allocation7 + $0x8] sm:$0xff]
    %v156 = vld [vmem:[#allocation7 + $0x10] sm:$0xff]
    %v157 = vld [vmem:[#allocation7 + $0x18] sm:$0xff]
    %v158 = vld [vmem:[#allocation7 + $0x20] sm:$0xff]
    %v159 = vld [vmem:[#allocation7 + $0x28] sm:$0xff]
    %v160 = vld [vmem:[#allocation7 + $0x30] sm:$0xff]
    %v161 = vld [vmem:[#allocation7 + $0x38] sm:$0xff]
    %v162 = vld [vmem:[#allocation7 + $0x40] sm:$0xff]
    %v163 = vld [vmem:[#allocation7 + $0x48] sm:$0xff]
    %v164 = vld [vmem:[#allocation7 + $0x50] sm:$0xff]
    %v165 = vld [vmem:[#allocation7 + $0x58] sm:$0xff]
    %v166 = vld [vmem:[#allocation7 + $0x60] sm:$0xff]
    %v167 = vld [vmem:[#allocation7 + $0x68] sm:$0xff]
    %v168 = vld [vmem:[#allocation7 + $0x70] sm:$0xff]
    %v169 = vld [vmem:[#allocation7 + $0x78] sm:$0xff]
    %v170 = vld [vmem:[#allocation7 + $0x80] sm:$0xff]
    %v171 = vld [vmem:[#allocation7 + $0x88] sm:$0xff]
    %v172 = vld [vmem:[#allocation7 + $0x90] sm:$0xff]
    %v173 = vld [vmem:[#allocation7 + $0x98] sm:$0xff]
    %v174 = vld [vmem:[#allocation7 + $0xa0] sm:$0xff]
    %v175 = vld [vmem:[#allocation7 + $0xa8] sm:$0xff]
    %v176 = vld [vmem:[#allocation7 + $0xb0] sm:$0xff]
    %v177 = vld [vmem:[#allocation7 + $0xb8] sm:$0xff]
    %v178 = vld [vmem:[#allocation7 + $0xc0] sm:$0xff]
    %v179 = vld [vmem:[#allocation7 + $0xc8] sm:$0xff]
    %v180 = vld [vmem:[#allocation7 + $0xd0] sm:$0xff]
    %v181 = vld [vmem:[#allocation7 + $0xd8] sm:$0xff]
    %v182 = vld [vmem:[#allocation7 + $0xe0] sm:$0xff]
    %v183 = vld [vmem:[#allocation7 + $0xe8] sm:$0xff]
    %v184 = vld [vmem:[#allocation7 + $0xf0] sm:$0xff]
    %v185 = vld [vmem:[#allocation7 + $0xf8] sm:$0xff]
    %v186 = vunpack.c.l.bf16 %v154
    %v187 = vunpack.c.h.bf16 %v154
    %v188 = vunpack.c.l.bf16 %v155
    %v189 = vunpack.c.h.bf16 %v155
    %v190 = vunpack.c.l.bf16 %v156
    %v191 = vunpack.c.h.bf16 %v156
    %v192 = vunpack.c.l.bf16 %v157
    %v193 = vunpack.c.h.bf16 %v157
    %v194 = vunpack.c.l.bf16 %v158
    %v195 = vunpack.c.h.bf16 %v158
    %v196 = vunpack.c.l.bf16 %v159
    %v197 = vunpack.c.h.bf16 %v159
    %v198 = vunpack.c.l.bf16 %v160
    %v199 = vunpack.c.h.bf16 %v160
    %v200 = vunpack.c.l.bf16 %v161
    %v201 = vunpack.c.h.bf16 %v161
    %v202 = vunpack.c.l.bf16 %v162
    %v203 = vunpack.c.h.bf16 %v162
    %v204 = vunpack.c.l.bf16 %v163
    %v205 = vunpack.c.h.bf16 %v163
    %v206 = vunpack.c.l.bf16 %v164
    %v207 = vunpack.c.h.bf16 %v164
    %v208 = vunpack.c.l.bf16 %v165
    %v209 = vunpack.c.h.bf16 %v165
    %v210 = vunpack.c.l.bf16 %v166
    %v211 = vunpack.c.h.bf16 %v166
    %v212 = vunpack.c.l.bf16 %v167
    %v213 = vunpack.c.h.bf16 %v167
    %v214 = vunpack.c.l.bf16 %v168
    %v215 = vunpack.c.h.bf16 %v168
    %v216 = vunpack.c.l.bf16 %v169
    %v217 = vunpack.c.h.bf16 %v169
    %v218 = vunpack.c.l.bf16 %v170
    %v219 = vunpack.c.h.bf16 %v170
    %v220 = vunpack.c.l.bf16 %v171
    %v221 = vunpack.c.h.bf16 %v171
    %v222 = vunpack.c.l.bf16 %v172
    %v223 = vunpack.c.h.bf16 %v172
    %v224 = vunpack.c.l.bf16 %v173
    %v225 = vunpack.c.h.bf16 %v173
    %v226 = vunpack.c.l.bf16 %v174
    %v227 = vunpack.c.h.bf16 %v174
    %v228 = vunpack.c.l.bf16 %v175
    %v229 = vunpack.c.h.bf16 %v175
    %v230 = vunpack.c.l.bf16 %v176
    %v231 = vunpack.c.h.bf16 %v176
    %v232 = vunpack.c.l.bf16 %v177
    %v233 = vunpack.c.h.bf16 %v177
    %v234 = vunpack.c.l.bf16 %v178
    %v235 = vunpack.c.h.bf16 %v178
    %v236 = vunpack.c.l.bf16 %v179
    %v237 = vunpack.c.h.bf16 %v179
    %v238 = vunpack.c.l.bf16 %v180
    %v239 = vunpack.c.h.bf16 %v180
    %v240 = vunpack.c.l.bf16 %v181
    %v241 = vunpack.c.h.bf16 %v181
    %v242 = vunpack.c.l.bf16 %v182
    %v243 = vunpack.c.h.bf16 %v182
    %v244 = vunpack.c.l.bf16 %v183
    %v245 = vunpack.c.h.bf16 %v183
    %v246 = vunpack.c.l.bf16 %v184
    %v247 = vunpack.c.h.bf16 %v184
    %v248 = vunpack.c.l.bf16 %v185
    %v249 = vunpack.c.h.bf16 %v185
    %v250 = vld [vmem:[%s3] sm:$0x3]
    %v252 = vlaneseq
    %v253 = vshrl.u32 %v252, 7
    %v254 = vsub.s32 0, %v253
    %v255 = vrot.slane %v57, %v254
    %v256 = vlaneseq
    %v257 = vshrl.u32 %v256, 7
    %v258 = vsub.s32 1, %v257
    %v259 = vrot.slane %v57, %v258
    %262 = vmatprep.subr.mxu0 %v91
    %263 = vmatpush1.msra.mxu0 %v90
    %264 = vmatprep.subr.mxu0 %v93
    %265 = vmatpush1.msra.mxu0 %v92
    %266 = vmatprep.subr.mxu0 %v95
    %267 = vmatpush1.msra.mxu0 %v94
    %268 = vmatprep.subr.mxu0 %v97
    %269 = vmatpush1.msra.mxu0 %v96
    %270 = vmatprep.subr.mxu0 %v99
    %271 = vmatpush1.msra.mxu0 %v98
    %272 = vmatprep.subr.mxu0 %v101
    %273 = vmatpush1.msra.mxu0 %v100
    %274 = vmatprep.subr.mxu0 %v103
    %275 = vmatpush1.msra.mxu0 %v102
    %276 = vmatprep.subr.mxu0 %v105
    %277 = vmatpush1.msra.mxu0 %v104
    %278 = vmatprep.subr.mxu0 %v107
    %279 = vmatpush1.msra.mxu0 %v106
    %280 = vmatprep.subr.mxu0 %v109
    %281 = vmatpush1.msra.mxu0 %v108
    %282 = vmatprep.subr.mxu0 %v111
    %283 = vmatpush1.msra.mxu0 %v110
    %284 = vmatprep.subr.mxu0 %v113
    %285 = vmatpush1.msra.mxu0 %v112
    %286 = vmatprep.subr.mxu0 %v115
    %287 = vmatpush1.msra.mxu0 %v114
    %288 = vmatprep.subr.mxu0 %v117
    %289 = vmatpush1.msra.mxu0 %v116
    %290 = vmatprep.subr.mxu0 %v119
    %291 = vmatpush1.msra.mxu0 %v118
    %292 = vmatprep.subr.mxu0 %v121
    %293 = vmatpush1.msra.mxu0 %v120
    %294 = vmatprep.subr.mxu0 %v123
    %295 = vmatpush1.msra.mxu0 %v122
    %296 = vmatprep.subr.mxu0 %v125
    %297 = vmatpush1.msra.mxu0 %v124
    %298 = vmatprep.subr.mxu0 %v127
    %299 = vmatpush1.msra.mxu0 %v126
    %300 = vmatprep.subr.mxu0 %v129
    %301 = vmatpush1.msra.mxu0 %v128
    %302 = vmatprep.subr.mxu0 %v131
    %303 = vmatpush1.msra.mxu0 %v130
    %304 = vmatprep.subr.mxu0 %v133
    %305 = vmatpush1.msra.mxu0 %v132
    %306 = vmatprep.subr.mxu0 %v135
    %307 = vmatpush1.msra.mxu0 %v134
    %308 = vmatprep.subr.mxu0 %v137
    %309 = vmatpush1.msra.mxu0 %v136
    %310 = vmatprep.subr.mxu0 %v139
    %311 = vmatpush1.msra.mxu0 %v138
    %312 = vmatprep.subr.mxu0 %v141
    %313 = vmatpush1.msra.mxu0 %v140
    %314 = vmatprep.subr.mxu0 %v143
    %315 = vmatpush1.msra.mxu0 %v142
    %316 = vmatprep.subr.mxu0 %v145
    %317 = vmatpush1.msra.mxu0 %v144
    %318 = vmatprep.subr.mxu0 %v147
    %319 = vmatpush1.msra.mxu0 %v146
    %320 = vmatprep.subr.mxu0 %v149
    %321 = vmatpush1.msra.mxu0 %v148
    %322 = vmatprep.subr.mxu0 %v151
    %323 = vmatpush1.msra.mxu0 %v150
    %324 = vmatprep.subr.mxu0 %v153
    %325 = vmatpush1.msra.mxu0 %v152
    %326 = vmatprep.mubr.f32.mxu0 %v259
    %327 = vmatmul.mubr.f32.gmra.mrb[0].mxu0 %v255
    %v328 = vpop.f32.mrb[0].mxu0
    %v329 = vadd.f32 0.0, %v328
    %v330 = vpop.f32.mrb[0].mxu0
    %v331 = vadd.f32 0.0, %v330
    %332 = vdwg.mxu0
    %v333 = vsub.f32 %v329, 1.0
    %v334 = vsub.f32 %v331, 1.0
    %v335 = vmax.f32 %v333, 0.0
    %v336 = vmax.f32 %v334, 0.0
    %v338 = vlaneseq
    %v339 = vshrl.u32 %v338, 7
    %v340 = vsub.s32 0, %v339
    %v341 = vrot.slane %v250, %v340
    %v342 = vlaneseq
    %v343 = vshrl.u32 %v342, 7
    %v344 = vsub.s32 1, %v343
    %v345 = vrot.slane %v250, %v344
    %348 = vmatprep.subr.mxu0 %v187
    %349 = vmatpush1.msra.mxu0 %v186
    %350 = vmatprep.subr.mxu0 %v189
    %351 = vmatpush1.msra.mxu0 %v188
    %352 = vmatprep.subr.mxu0 %v191
    %353 = vmatpush1.msra.mxu0 %v190
    %354 = vmatprep.subr.mxu0 %v193
    %355 = vmatpush1.msra.mxu0 %v192
    %356 = vmatprep.subr.mxu0 %v195
    %357 = vmatpush1.msra.mxu0 %v194
    %358 = vmatprep.subr.mxu0 %v197
    %359 = vmatpush1.msra.mxu0 %v196
    %360 = vmatprep.subr.mxu0 %v199
    %361 = vmatpush1.msra.mxu0 %v198
    %362 = vmatprep.subr.mxu0 %v201
    %363 = vmatpush1.msra.mxu0 %v200
    %364 = vmatprep.subr.mxu0 %v203
    %365 = vmatpush1.msra.mxu0 %v202
    %366 = vmatprep.subr.mxu0 %v205
    %367 = vmatpush1.msra.mxu0 %v204
    %368 = vmatprep.subr.mxu0 %v207
    %369 = vmatpush1.msra.mxu0 %v206
    %370 = vmatprep.subr.mxu0 %v209
    %371 = vmatpush1.msra.mxu0 %v208
    %372 = vmatprep.subr.mxu0 %v211
    %373 = vmatpush1.msra.mxu0 %v210
    %374 = vmatprep.subr.mxu0 %v213
    %375 = vmatpush1.msra.mxu0 %v212
    %376 = vmatprep.subr.mxu0 %v215
    %377 = vmatpush1.msra.mxu0 %v214
    %378 = vmatprep.subr.mxu0 %v217
    %379 = vmatpush1.msra.mxu0 %v216
    %380 = vmatprep.subr.mxu0 %v219
    %381 = vmatpush1.msra.mxu0 %v218
    %382 = vmatprep.subr.mxu0 %v221
    %383 = vmatpush1.msra.mxu0 %v220
    %384 = vmatprep.subr.mxu0 %v223
    %385 = vmatpush1.msra.mxu0 %v222
    %386 = vmatprep.subr.mxu0 %v225
    %387 = vmatpush1.msra.mxu0 %v224
    %388 = vmatprep.subr.mxu0 %v227
    %389 = vmatpush1.msra.mxu0 %v226
    %390 = vmatprep.subr.mxu0 %v229
    %391 = vmatpush1.msra.mxu0 %v228
    %392 = vmatprep.subr.mxu0 %v231
    %393 = vmatpush1.msra.mxu0 %v230
    %394 = vmatprep.subr.mxu0 %v233
    %395 = vmatpush1.msra.mxu0 %v232
    %396 = vmatprep.subr.mxu0 %v235
    %397 = vmatpush1.msra.mxu0 %v234
    %398 = vmatprep.subr.mxu0 %v237
    %399 = vmatpush1.msra.mxu0 %v236
    %400 = vmatprep.subr.mxu0 %v239
    %401 = vmatpush1.msra.mxu0 %v238
    %402 = vmatprep.subr.mxu0 %v241
    %403 = vmatpush1.msra.mxu0 %v240
    %404 = vmatprep.subr.mxu0 %v243
    %405 = vmatpush1.msra.mxu0 %v242
    %406 = vmatprep.subr.mxu0 %v245
    %407 = vmatpush1.msra.mxu0 %v244
    %408 = vmatprep.subr.mxu0 %v247
    %409 = vmatpush1.msra.mxu0 %v246
    %410 = vmatprep.subr.mxu0 %v249
    %411 = vmatpush1.msra.mxu0 %v248
    %412 = vmatprep.mubr.f32.mxu0 %v336
    %413 = vmatmul.mubr.f32.gmra.mrb[0].mxu0 %v335
    %v414 = vpop.f32.mrb[0].mxu0
    %v415 = vadd.f32 %v341, %v414
    %v416 = vpop.f32.mrb[0].mxu0
    %v417 = vadd.f32 %v345, %v416
    %418 = vdwg.mxu0
    %v421 = vcombine.low %v415, %v417
    %v423 = vunpack.c.l.s4 1966171168
    %v424 = vunpack.c.0.s8 %v423
    %v425 = vlaneseq
    %v426 = vshrl.u32 %v425, 7
    %v427 = vsub.s32 %v424, %v426
    %v428 = vrot.slane %v421, %v427
    %v430 = vunpack.c.l.s4 1966171168
    %v431 = vunpack.c.0.s8 %v430
    %v432 = vlaneseq
    %v433 = vshrl.u32 %v432, 7
    %v434 = vsub.s32 %v431, %v433
    %v435 = vrot.slane %v428, %v434
    %v437 = vlaneseq
    %vm438 = vcmp.ge.s32.totalorder %v437, 0
    %vm439 = vcmp.lt.s32.totalorder %v437, 256
    %vm440 = vmand %vm438, %vm439
    %441 = vst.msk [vmem:[#allocation8] sm:$0x3] %vm440, %v435
    // Predicated region
    $region30: #{tpu_custom_call.1} parent=1 // pred_check
      _
    $region31: #{tpu_custom_call.1} parent=1 // pred_check_branch
      %443 = sbr.rel (0) target = $region33
    $region32: #{tpu_custom_call.1} parent=1 // pred_region
      %s445 = ssub.s32 32, 32
      %446 = vsyncadd [#allocation4], %s445
      %s448 = sshll.u32 [#allocation8], 4
      %s449 = int_to_ptr.vmem [resolvable:$true] %s448
      %451 = dma.vmem_to_hbm [thread:$0]  %s449, 32, %s4, [#allocation4]
    $region33: #{tpu_custom_call.1} parent=1 // pred_fallthru
      _
    // Predicated region
    $region34: #{tpu_custom_call.1} parent=1 // pred_check
      _
    $region35: #{tpu_custom_call.1} parent=1 // pred_check_branch
      %453 = sbr.rel (0) target = $region37
    $region36: #{tpu_custom_call.1} parent=1 // pred_region
      %454 = dma.done [#allocation4], 32
    $region37: #{tpu_custom_call.1} parent=1 // pred_fallthru
      _
    %455 = vsyncpa [#allocation3], 1
    %456 = vsyncpa [#allocation6], 1
    %457 = vsyncpa [#allocation4], 1

</llo_original>
